<compile_context>
chip_gen: v6e
topology: v6e:2x2x1
jax: 0.10.0
libtpu: 0.0.40
codegen_flags: <defaults>
</compile_context>

<pallas_src>
import functools
import math

import jax
import jax.numpy as jnp
from jax.experimental import pallas as pl
from jax.experimental.pallas import tpu as pltpu


def _round_up(x, m):
    return ((x + m - 1) // m) * m


def _pick_rows_tile(n, target, multiple):
    """(tile, padded extent) for a row dim of size n.

    tile is a multiple of lcm(8, multiple); padded extent is a multiple of
    tile; prefer >=2 grid steps so both v7x TensorCores get work."""
    g = (8 * multiple) // math.gcd(8, multiple)
    t = min(_round_up(target, g), _round_up(max(n, 1), g))
    npad = _round_up(n, t)
    if npad // t < 2 and t > g:
        t_half = _round_up(t // 2, g)
        if t_half < t:
            t = t_half
            npad = _round_up(n, t)
    return t, npad


# ----------------------------------------------------------------------------
# Kernel 1: fused event-encode + Linear(F->H) + max/mean/sum pooling.
# ----------------------------------------------------------------------------
def _encode_pool_kernel(tok_ref, bin_ref, tf_ref, tbl_ref, wtime_ref, bias_ref,
                        out_ref, ind_ref, hbuf_ref, *, rc):
    TB, S = tok_ref.shape
    Kc, Hp = tbl_ref.shape

    # --- Phase 1: one combined (token | shifted-bin) one-hot for every
    # (row, event) pair and a SINGLE MXU matmul per grid block, streamed into
    # the VMEM scratch.  hbuf row layout is event-major: row = s * TB + tb.
    tok = tok_ref[...]                                     # (TB, S) int32
    binv = bin_ref[...]                                    # (TB, S) int32 (+Vp)
    k_iota = jax.lax.broadcasted_iota(jnp.int32, (TB, Kc), 1)
    oh_parts = []
    for s in range(S):                                     # static unroll
        hit = jnp.logical_or(tok[:, s:s + 1] == k_iota,
                             binv[:, s:s + 1] == k_iota)
        oh_parts.append(hit.astype(jnp.float32))           # (TB, Kc)
    oh = jnp.concatenate(oh_parts, axis=0)                 # (S*TB, Kc)
    hbuf_ref[...] = jnp.dot(oh, tbl_ref[...],
                            preferred_element_type=jnp.float32)

    # --- Phase 2: streaming max / mean / sum / first-argmax reduction in
    # small row chunks so the live accumulator set stays at a few vregs.
    inv_s = 1.0 / S
    w_log = wtime_ref[0:1, :]                              # (1, Hp)
    w_exp = wtime_ref[1:2, :]                              # (1, Hp)
    bias = bias_ref[...]                                   # (1, Hp)

    @pl.loop(0, TB // rc)
    def _(c):
        rbase = pl.multiple_of(c * rc, 8)
        maxv = hbuf_ref[pl.ds(rbase, rc), :]               # event s = 0
        sumv = maxv
        ind = jnp.zeros((rc, Hp), jnp.int32)
        for s in range(1, S):                              # static unroll
            h_s = hbuf_ref[pl.ds(pl.multiple_of(s * TB + c * rc, 8), rc), :]
            newmax = h_s > maxv                            # strict > -> first argmax
            ind = jnp.where(newmax, s, ind)
            maxv = jnp.where(newmax, h_s, maxv)
            sumv = sumv + h_s

        # Per-row time/bias term (constant over the event dim), added once.
        tf = tf_ref[pl.ds(rbase, rc), :]                   # (rc, 2) f32
        row_term = (tf[:, 0:1] * w_log + tf[:, 1:2] * w_exp + bias)  # (rc, Hp)

        out_ref[pl.ds(rbase, rc), 0:Hp] = maxv + row_term
        out_ref[pl.ds(rbase, rc), Hp:2 * Hp] = sumv * inv_s + row_term
        out_ref[pl.ds(rbase, rc), 2 * Hp:3 * Hp] = sumv + float(S) * row_term
        ind_ref[pl.ds(rbase, rc), :] = ind


def fused_encode_pool(tokens, bins_shifted, time_feat, table, w_time, bias, *,
                      n_tables, tb_target=512):
    """tokens/bins_shifted: (B', S) int32, B' = N*L*T rows interleaved as
    nl*T + t (bin ids already offset by Vp).  time_feat: (B', 2) f32 =
    [log(nl+1), exp(nl/1000)-1].  Returns the PADDED pooled slab
    (Bpad, 3*Hp) f32, measure_ind (Bpad, Hp) int32, and Bpad."""
    Bp, S = tokens.shape
    Kc, Hp = table.shape

    TB, Bpad = _pick_rows_tile(Bp, tb_target, n_tables)
    if Bpad != Bp:
        pad = Bpad - Bp
        tokens = jnp.pad(tokens, ((0, pad), (0, 0)), constant_values=-1)
        bins_shifted = jnp.pad(bins_shifted, ((0, pad), (0, 0)),
                               constant_values=-1)
        time_feat = jnp.pad(time_feat, ((0, pad), (0, 0)))
    rc = math.gcd(TB, 32)

    kernel = functools.partial(_encode_pool_kernel, rc=rc)
    flops = 2 * Bpad * S * Kc * Hp
    bytes_acc = 4 * (2 * Bpad * S + 2 * Bpad + (Kc + 9) * Hp + Bpad * 4 * Hp)

    pooled, ind = pl.pallas_call(
        kernel,
        out_shape=(jax.ShapeDtypeStruct((Bpad, 3 * Hp), jnp.float32),
                   jax.ShapeDtypeStruct((Bpad, Hp), jnp.int32)),
        grid_spec=pltpu.PrefetchScalarGridSpec(
            num_scalar_prefetch=0,
            grid=(Bpad // TB,),
            in_specs=[
                pl.BlockSpec((TB, S), lambda i: (i, 0)),
                pl.BlockSpec((TB, S), lambda i: (i, 0)),
                pl.BlockSpec((TB, 2), lambda i: (i, 0)),
                pl.BlockSpec((Kc, Hp), lambda i: (0, 0)),
                pl.BlockSpec((8, Hp), lambda i: (0, 0)),
                pl.BlockSpec((1, Hp), lambda i: (0, 0)),
            ],
            out_specs=(
                pl.BlockSpec((TB, 3 * Hp), lambda i: (i, 0)),
                pl.BlockSpec((TB, Hp), lambda i: (i, 0)),
            ),
            scratch_shapes=[pltpu.VMEM((S * TB, Hp), jnp.float32)],
        ),
        compiler_params=pltpu.CompilerParams(
            dimension_semantics=("parallel",)),
        cost_estimate=pl.CostEstimate(flops=int(flops), transcendentals=0,
                                      bytes_accessed=int(bytes_acc)),
    )(tokens, bins_shifted, time_feat, table, w_time, bias)
    return pooled, ind, Bpad


# ----------------------------------------------------------------------------
# Kernel 2: mixer = Linear -> ReLU -> Linear -> ReLU, tiled over rows.
# ----------------------------------------------------------------------------
def _mixer_kernel(x_ref, w1_ref, b1_ref, w2_ref, b2_ref, o_ref):
    h = jnp.dot(x_ref[...], w1_ref[...], preferred_element_type=jnp.float32)
    h = jnp.maximum(h + b1_ref[...], 0.0)
    o = jnp.dot(h, w2_ref[...], preferred_element_type=jnp.float32)
    o_ref[...] = jnp.maximum(o + b2_ref[...], 0.0)


def mixer(x, w1, b1, w2, b2, *, tm_target=512):
    M, Din = x.shape
    D1 = w1.shape[1]
    P = w2.shape[1]

    TM, Mpad = _pick_rows_tile(M, tm_target, 1)
    if Mpad != M:
        x = jnp.pad(x, ((0, Mpad - M), (0, 0)))

    flops = 2 * Mpad * (Din * D1 + D1 * P)
    bytes_acc = 4 * (Mpad * Din + Din * D1 + D1 * P + D1 + P + Mpad * P)

    out = pl.pallas_call(
        _mixer_kernel,
        out_shape=jax.ShapeDtypeStruct((Mpad, P), jnp.float32),
        grid_spec=pltpu.PrefetchScalarGridSpec(
            num_scalar_prefetch=0,
            grid=(Mpad // TM,),
            in_specs=[
                pl.BlockSpec((TM, Din), lambda i: (i, 0)),
                pl.BlockSpec((Din, D1), lambda i: (0, 0)),
                pl.BlockSpec((1, D1), lambda i: (0, 0)),
                pl.BlockSpec((D1, P), lambda i: (0, 0)),
                pl.BlockSpec((1, P), lambda i: (0, 0)),
            ],
            out_specs=pl.BlockSpec((TM, P), lambda i: (i, 0)),
        ),
        compiler_params=pltpu.CompilerParams(
            dimension_semantics=("parallel",)),
        cost_estimate=pl.CostEstimate(flops=int(flops), transcendentals=0,
                                      bytes_accessed=int(bytes_acc)),
    )(x, w1, b1, w2, b2)
    return out


# ----------------------------------------------------------------------------
# Forward pass.
# ----------------------------------------------------------------------------
def deep_timestep_encoder_forward(inputs, params, table_names, include_time=True):
    """inputs: list of (N, L, S, 2) int32 (channel 0 = token id, 1 = bin id)."""
    emb_w = params["emb_weight"].astype(jnp.float32)      # (vocab, E)
    bins_tbl = params["bins_table"].astype(jnp.float32)   # (n_bins+1, n_bins)
    W = params["model_w"].astype(jnp.float32)              # (F, H) rows [emb|time|bins]
    b = params["model_b"].astype(jnp.float32)              # (H,)

    vocab, E = emb_w.shape
    n_bins = bins_tbl.shape[1]
    H = W.shape[1]
    T = len(inputs)
    N, L, S, _ = inputs[0].shape
    NL = N * L

    Hp = _round_up(max(H, 128), 128)     # lane-dense hidden
    Vp = _round_up(vocab, 8)
    NBp = _round_up(n_bins + 1, 8)
    Kc = Vp + NBp                        # combined one-hot width (mult of 8)

    if include_time:
        w_time_rows = W[E:E + 2]
        bins_off = E + 2
    else:
        w_time_rows = jnp.zeros((2, H), jnp.float32)
        bins_off = E

    # One combined pre-projected lookup table (Linear weight folded in).
    table = jnp.zeros((Kc, Hp), jnp.float32)
    table = table.at[:vocab, :H].set(emb_w @ W[:E])
    table = table.at[Vp:Vp + n_bins + 1, :H].set(
        bins_tbl @ W[bins_off:bins_off + n_bins])
    w_time = jnp.zeros((8, Hp), jnp.float32).at[:2, :H].set(w_time_rows)
    bias = jnp.zeros((1, Hp), jnp.float32).at[0, :H].set(b)

    # Interleave all tables' flattened rows (row = nl * T + t); weights shared.
    tok_list = [inp.reshape(NL, S, 2)[:, :, 0].astype(jnp.int32) for inp in inputs]
    bin_list = [inp.reshape(NL, S, 2)[:, :, 1].astype(jnp.int32) for inp in inputs]
    tokens = jnp.stack(tok_list, axis=1).reshape(NL * T, S)
    bins_shifted = jnp.stack(bin_list, axis=1).reshape(NL * T, S) + Vp

    # Per-row time features (8 B/row), avoids in-kernel integer division.
    nl_idx = jnp.arange(NL, dtype=jnp.float32)
    tf_nl = jnp.stack([jnp.log(nl_idx + 1.0),
                       jnp.exp(nl_idx / 1000.0) - 1.0], axis=1)     # (NL, 2)
    time_feat = jnp.repeat(tf_nl, T, axis=0)                        # (NL*T, 2)

    pooled, ind, Bpad = fused_encode_pool(tokens, bins_shifted, time_feat,
                                          table, w_time, bias, n_tables=T)

    # Padded pooled slab feeds the mixer directly: (Bpad, 3*Hp) -> (Bpad/T,
    # T*3*Hp) is a free row-major reshape, no slice -> re-pad HBM round trip.
    mixer_in = pooled.reshape(Bpad // T, T * 3 * Hp)

    w1 = params["mix_w1"].astype(jnp.float32)               # (T*3*H, D1)
    b1 = params["mix_b1"].astype(jnp.float32)               # (D1,)
    w2 = params["mix_w2"].astype(jnp.float32)               # (D1, P)
    b2 = params["mix_b2"].astype(jnp.float32)               # (P,)
    D1 = w1.shape[1]
    P = w2.shape[1]
    D1p = _round_up(max(D1, 128), 128)

    # Fold the H->Hp padding into zero rows of w1 and pad D1->D1p (zero cols
    # in w1/b1, zero rows in w2) so both mixer matmuls are lane-dense.
    w1_pad = jnp.zeros((T, 3, Hp, D1p), jnp.float32).at[:, :, :H, :D1].set(
        w1.reshape(T, 3, H, D1)).reshape(T * 3 * Hp, D1p)
    b1_pad = jnp.zeros((1, D1p), jnp.float32).at[0, :D1].set(b1)
    w2_pad = jnp.zeros((D1p, P), jnp.float32).at[:D1, :].set(w2)
    b2_pad = b2.reshape(1, P)

    mixed = mixer(mixer_in, w1_pad, b1_pad, w2_pad, b2_pad)
    mixed = mixed[:NL].reshape(N, L, P)                      # (N, L, pat_hidden)

    ind_valid = ind[:NL * T, :H].reshape(NL, T, H)
    measure_inds = {name: ind_valid[:, t, :] for t, name in enumerate(table_names)}
    return mixed, {"measure_inds": measure_inds}


# ----------------------------------------------------------------------------
# Pure-JAX reference of the same reconstructed forward (for validation).
# ----------------------------------------------------------------------------
def _reference_forward(inputs, params, include_time):
    emb_w = params["emb_weight"]
    bins_tbl = params["bins_table"]
    W = params["model_w"]
    b = params["model_b"]
    outs = []
    for inp in inputs:
        N, L, S, _ = inp.shape
        x = inp.reshape(N * L, S, 2)
        feats = [emb_w[x[:, :, 0]]]
        if include_time:
            t = jnp.arange(N * L, dtype=jnp.float32)[:, None, None]
            t = jnp.broadcast_to(t, (N * L, S, 1))
            feats += [jnp.log(t + 1.0), jnp.exp(t / 1000.0) - 1.0]
        feats.append(bins_tbl[x[:, :, 1]])
        f = jnp.concatenate(feats, axis=-1)
        h = f @ W + b
        outs.append(jnp.concatenate([h.max(1), h.mean(1), h.sum(1)], axis=-1))
    mix_in = jnp.concatenate(outs, axis=-1)
    h1 = jnp.maximum(mix_in @ params["mix_w1"] + params["mix_b1"], 0.0)
    h2 = jnp.maximum(h1 @ params["mix_w2"] + params["mix_b2"], 0.0)
    N, L = inputs[0].shape[:2]
    return h2.reshape(N, L, -1)


if __name__ == "__main__":
    # Small shapes consistent with the module defaults.
    vocab_size = 30
    emb_dim = 100
    n_bins = 9
    include_time = True
    hidden_size = 50
    pat_hidden_size = 128
    n_tables = 2
    N, L, S = 2, 4, 8
    input_size = emb_dim + n_bins + (2 if include_time else 0)   # 111
    model_out = 3 * hidden_size                                  # 150

    key = jax.random.PRNGKey(0)
    keys = jax.random.split(key, 8)

    emb_weight = jax.random.normal(keys[0], (vocab_size, emb_dim), jnp.float32) * 0.1
    emb_weight = emb_weight.at[0].set(0.0)   # padding_idx=0
    bins_table = jnp.concatenate(
        [jnp.zeros((1, n_bins), jnp.float32), jnp.eye(n_bins, dtype=jnp.float32)],
        axis=0)

    params = dict(
        emb_weight=emb_weight,
        bins_table=bins_table,
        model_w=jax.random.normal(keys[1], (input_size, hidden_size), jnp.float32) * 0.05,
        model_b=jax.random.normal(keys[2], (hidden_size,), jnp.float32) * 0.05,
        mix_w1=jax.random.normal(keys[3], (n_tables * model_out, model_out), jnp.float32) * 0.05,
        mix_b1=jax.random.normal(keys[4], (model_out,), jnp.float32) * 0.05,
        mix_w2=jax.random.normal(keys[5], (model_out, pat_hidden_size), jnp.float32) * 0.05,
        mix_b2=jax.random.normal(keys[6], (pat_hidden_size,), jnp.float32) * 0.05,
    )

    inputs = []
    ikeys = jax.random.split(keys[7], n_tables)
    for k in ikeys:
        k1, k2 = jax.random.split(k)
        tokens = jax.random.randint(k1, (N, L, S, 1), 0, vocab_size)
        bins_idx = jax.random.randint(k2, (N, L, S, 1), 0, n_bins + 1)
        inputs.append(jnp.concatenate([tokens, bins_idx], axis=-1).astype(jnp.int32))

    table_names = [f"table{i}" for i in range(n_tables)]
    out, extra = deep_timestep_encoder_forward(inputs, params, table_names,
                                               include_time=include_time)
    out = jax.block_until_ready(out)

    assert out.shape == (N, L, pat_hidden_size)
    assert bool(jnp.all(jnp.isfinite(out)))
    for name in table_names:
        mi = extra["measure_inds"][name]
        assert mi.shape == (N * L, hidden_size)
        assert bool(jnp.all((mi >= 0) & (mi < S)))

    ref_out = _reference_forward(inputs, params, include_time)
    max_err = float(jnp.max(jnp.abs(out - ref_out)))
    assert max_err < 5e-3, f"mismatch vs reference: {max_err}"
    print("KERNEL_OK")
</pallas_src>

<mosaic_0001>
module attributes {stable_mosaic.version = 11 : i64} {
  func.func @_encode_pool_kernel(%arg0: i32, %arg1: memref<8x8xi32, #tpu.memory_space<vmem>>, %arg2: memref<8x8xi32, #tpu.memory_space<vmem>>, %arg3: memref<8x2xf32, #tpu.memory_space<vmem>>, %arg4: memref<48x128xf32, #tpu.memory_space<vmem>>, %arg5: memref<8x128xf32, #tpu.memory_space<vmem>>, %arg6: memref<1x128xf32, #tpu.memory_space<vmem>>, %arg7: memref<8x384xf32, #tpu.memory_space<vmem>>, %arg8: memref<8x128xi32, #tpu.memory_space<vmem>>, %arg9: memref<64x128xf32, #tpu.memory_space<vmem>>) attributes {dimension_semantics = [#tpu.dimension_semantics<parallel>], iteration_bounds = array<i64: 2>, scalar_prefetch = 0 : i64, scratch_operands = 1 : i64, tpu.core_type = #tpu.core_type<tc>, window_params = [{transform_indices = @transform_0, window_bounds = array<i64: 8, 8>}, {transform_indices = @transform_1, window_bounds = array<i64: 8, 8>}, {transform_indices = @transform_2, window_bounds = array<i64: 8, 2>}, {pipeline_mode = #tpu.pipeline_mode<synchronous>, transform_indices = @transform_3, window_bounds = array<i64: 48, 128>}, {pipeline_mode = #tpu.pipeline_mode<synchronous>, transform_indices = @transform_4, window_bounds = array<i64: 8, 128>}, {pipeline_mode = #tpu.pipeline_mode<synchronous>, transform_indices = @transform_5, window_bounds = array<i64: 1, 128>}, {transform_indices = @transform_6, window_bounds = array<i64: 8, 384>}, {transform_indices = @transform_7, window_bounds = array<i64: 8, 128>}]} {
    %c0 = arith.constant 0 : index
    %c0_0 = arith.constant 0 : index
    %0 = vector.load %arg1[%c0, %c0_0] : memref<8x8xi32, #tpu.memory_space<vmem>>, vector<8x8xi32>
    %c0_1 = arith.constant 0 : index
    %c0_2 = arith.constant 0 : index
    %1 = vector.load %arg2[%c0_1, %c0_2] : memref<8x8xi32, #tpu.memory_space<vmem>>, vector<8x8xi32>
    %2 = tpu.iota {dimensions = array<i32: 1>} : vector<8x48xi32>
    %3 = vector.extract_strided_slice %0 {offsets = [0, 0], sizes = [8, 1], strides = [1, 1]} : vector<8x8xi32> to vector<8x1xi32>
    %4 = vector.broadcast %3 : vector<8x1xi32> to vector<8x48xi32>
    %5 = arith.cmpi eq, %4, %2 : vector<8x48xi32>
    %6 = vector.extract_strided_slice %1 {offsets = [0, 0], sizes = [8, 1], strides = [1, 1]} : vector<8x8xi32> to vector<8x1xi32>
    %7 = vector.broadcast %6 : vector<8x1xi32> to vector<8x48xi32>
    %8 = arith.cmpi eq, %7, %2 : vector<8x48xi32>
    %9 = arith.ori %5, %8 : vector<8x48xi1>
    %10 = arith.extui %9 : vector<8x48xi1> to vector<8x48xi32>
    %11 = arith.sitofp %10 : vector<8x48xi32> to vector<8x48xf32>
    %12 = vector.extract_strided_slice %0 {offsets = [0, 1], sizes = [8, 1], strides = [1, 1]} : vector<8x8xi32> to vector<8x1xi32>
    %13 = vector.broadcast %12 : vector<8x1xi32> to vector<8x48xi32>
    %14 = arith.cmpi eq, %13, %2 : vector<8x48xi32>
    %15 = vector.extract_strided_slice %1 {offsets = [0, 1], sizes = [8, 1], strides = [1, 1]} : vector<8x8xi32> to vector<8x1xi32>
    %16 = vector.broadcast %15 : vector<8x1xi32> to vector<8x48xi32>
    %17 = arith.cmpi eq, %16, %2 : vector<8x48xi32>
    %18 = arith.ori %14, %17 : vector<8x48xi1>
    %19 = arith.extui %18 : vector<8x48xi1> to vector<8x48xi32>
    %20 = arith.sitofp %19 : vector<8x48xi32> to vector<8x48xf32>
    %21 = vector.extract_strided_slice %0 {offsets = [0, 2], sizes = [8, 1], strides = [1, 1]} : vector<8x8xi32> to vector<8x1xi32>
    %22 = vector.broadcast %21 : vector<8x1xi32> to vector<8x48xi32>
    %23 = arith.cmpi eq, %22, %2 : vector<8x48xi32>
    %24 = vector.extract_strided_slice %1 {offsets = [0, 2], sizes = [8, 1], strides = [1, 1]} : vector<8x8xi32> to vector<8x1xi32>
    %25 = vector.broadcast %24 : vector<8x1xi32> to vector<8x48xi32>
    %26 = arith.cmpi eq, %25, %2 : vector<8x48xi32>
    %27 = arith.ori %23, %26 : vector<8x48xi1>
    %28 = arith.extui %27 : vector<8x48xi1> to vector<8x48xi32>
    %29 = arith.sitofp %28 : vector<8x48xi32> to vector<8x48xf32>
    %30 = vector.extract_strided_slice %0 {offsets = [0, 3], sizes = [8, 1], strides = [1, 1]} : vector<8x8xi32> to vector<8x1xi32>
    %31 = vector.broadcast %30 : vector<8x1xi32> to vector<8x48xi32>
    %32 = arith.cmpi eq, %31, %2 : vector<8x48xi32>
    %33 = vector.extract_strided_slice %1 {offsets = [0, 3], sizes = [8, 1], strides = [1, 1]} : vector<8x8xi32> to vector<8x1xi32>
    %34 = vector.broadcast %33 : vector<8x1xi32> to vector<8x48xi32>
    %35 = arith.cmpi eq, %34, %2 : vector<8x48xi32>
    %36 = arith.ori %32, %35 : vector<8x48xi1>
    %37 = arith.extui %36 : vector<8x48xi1> to vector<8x48xi32>
    %38 = arith.sitofp %37 : vector<8x48xi32> to vector<8x48xf32>
    %39 = vector.extract_strided_slice %0 {offsets = [0, 4], sizes = [8, 1], strides = [1, 1]} : vector<8x8xi32> to vector<8x1xi32>
    %40 = vector.broadcast %39 : vector<8x1xi32> to vector<8x48xi32>
    %41 = arith.cmpi eq, %40, %2 : vector<8x48xi32>
    %42 = vector.extract_strided_slice %1 {offsets = [0, 4], sizes = [8, 1], strides = [1, 1]} : vector<8x8xi32> to vector<8x1xi32>
    %43 = vector.broadcast %42 : vector<8x1xi32> to vector<8x48xi32>
    %44 = arith.cmpi eq, %43, %2 : vector<8x48xi32>
    %45 = arith.ori %41, %44 : vector<8x48xi1>
    %46 = arith.extui %45 : vector<8x48xi1> to vector<8x48xi32>
    %47 = arith.sitofp %46 : vector<8x48xi32> to vector<8x48xf32>
    %48 = vector.extract_strided_slice %0 {offsets = [0, 5], sizes = [8, 1], strides = [1, 1]} : vector<8x8xi32> to vector<8x1xi32>
    %49 = vector.broadcast %48 : vector<8x1xi32> to vector<8x48xi32>
    %50 = arith.cmpi eq, %49, %2 : vector<8x48xi32>
    %51 = vector.extract_strided_slice %1 {offsets = [0, 5], sizes = [8, 1], strides = [1, 1]} : vector<8x8xi32> to vector<8x1xi32>
    %52 = vector.broadcast %51 : vector<8x1xi32> to vector<8x48xi32>
    %53 = arith.cmpi eq, %52, %2 : vector<8x48xi32>
    %54 = arith.ori %50, %53 : vector<8x48xi1>
    %55 = arith.extui %54 : vector<8x48xi1> to vector<8x48xi32>
    %56 = arith.sitofp %55 : vector<8x48xi32> to vector<8x48xf32>
    %57 = vector.extract_strided_slice %0 {offsets = [0, 6], sizes = [8, 1], strides = [1, 1]} : vector<8x8xi32> to vector<8x1xi32>
    %58 = vector.broadcast %57 : vector<8x1xi32> to vector<8x48xi32>
    %59 = arith.cmpi eq, %58, %2 : vector<8x48xi32>
    %60 = vector.extract_strided_slice %1 {offsets = [0, 6], sizes = [8, 1], strides = [1, 1]} : vector<8x8xi32> to vector<8x1xi32>
    %61 = vector.broadcast %60 : vector<8x1xi32> to vector<8x48xi32>
    %62 = arith.cmpi eq, %61, %2 : vector<8x48xi32>
    %63 = arith.ori %59, %62 : vector<8x48xi1>
    %64 = arith.extui %63 : vector<8x48xi1> to vector<8x48xi32>
    %65 = arith.sitofp %64 : vector<8x48xi32> to vector<8x48xf32>
    %66 = vector.extract_strided_slice %0 {offsets = [0, 7], sizes = [8, 1], strides = [1, 1]} : vector<8x8xi32> to vector<8x1xi32>
    %67 = vector.broadcast %66 : vector<8x1xi32> to vector<8x48xi32>
    %68 = arith.cmpi eq, %67, %2 : vector<8x48xi32>
    %69 = vector.extract_strided_slice %1 {offsets = [0, 7], sizes = [8, 1], strides = [1, 1]} : vector<8x8xi32> to vector<8x1xi32>
    %70 = vector.broadcast %69 : vector<8x1xi32> to vector<8x48xi32>
    %71 = arith.cmpi eq, %70, %2 : vector<8x48xi32>
    %72 = arith.ori %68, %71 : vector<8x48xi1>
    %73 = arith.extui %72 : vector<8x48xi1> to vector<8x48xi32>
    %74 = arith.sitofp %73 : vector<8x48xi32> to vector<8x48xf32>
    %75 = tpu.concatenate %11, %20, %29, %38, %47, %56, %65, %74 in 0 : vector<8x48xf32>, vector<8x48xf32>, vector<8x48xf32>, vector<8x48xf32>, vector<8x48xf32>, vector<8x48xf32>, vector<8x48xf32>, vector<8x48xf32> -> vector<64x48xf32>
    %c0_3 = arith.constant 0 : index
    %c0_4 = arith.constant 0 : index
    %76 = vector.load %arg4[%c0_3, %c0_4] : memref<48x128xf32, #tpu.memory_space<vmem>>, vector<48x128xf32>
    %cst = arith.constant dense<0.000000e+00> : vector<64x128xf32>
    %77 = tpu.matmul %75, %76, %cst {dimension_numbers = #tpu.dot_dimension_numbers<[1], [0], [0], [1], [0, 0, 1, 1], [], []>} : vector<64x48xf32>, vector<48x128xf32>, vector<64x128xf32> -> vector<64x128xf32>
    %c0_5 = arith.constant 0 : index
    %c0_6 = arith.constant 0 : index
    %78 = vector.load %arg9[%c0_5, %c0_6] : memref<64x128xf32, #tpu.memory_space<vmem>>, vector<64x128xf32>
    tpu.vector_store %arg9[%c0_5, %c0_6], %77 {strides = array<i32>} : memref<64x128xf32, #tpu.memory_space<vmem>>, vector<64x128xf32>,
    %c0_7 = arith.constant 0 : index
    %c0_8 = arith.constant 0 : index
    %79 = vector.load %arg5[%c0_7, %c0_8] : memref<8x128xf32, #tpu.memory_space<vmem>>, vector<1x128xf32>
    %c1 = arith.constant 1 : index
    %c0_9 = arith.constant 0 : index
    %80 = vector.load %arg5[%c1, %c0_9] : memref<8x128xf32, #tpu.memory_space<vmem>>, vector<1x128xf32>
    %c0_10 = arith.constant 0 : index
    %c0_11 = arith.constant 0 : index
    %81 = vector.load %arg6[%c0_10, %c0_11] : memref<1x128xf32, #tpu.memory_space<vmem>>, vector<1x128xf32>
    %c0_i32 = arith.constant 0 : i32
    %c1_i32 = arith.constant 1 : i32
    %82 = arith.muli %c0_i32, %c1_i32 : i32
    %c0_i32_12 = arith.constant 0 : i32
    %83 = arith.addi %c0_i32_12, %82 : i32
    %c8_i32 = arith.constant 8 : i32
    %84 = arith.muli %83, %c8_i32 : i32
    %85 = tpu.assume_multiple %84, 8 : i32
    %86 = arith.index_cast %85 : i32 to index
    %c0_13 = arith.constant 0 : index
    %87 = vector.load %arg9[%86, %c0_13] : memref<64x128xf32, #tpu.memory_space<vmem>>, vector<8x128xf32>
    %c0_i32_14 = arith.constant 0 : i32
    %88 = vector.broadcast %c0_i32_14 : i32 to vector<8x128xi32>
    %c8_i32_15 = arith.constant 8 : i32
    %89 = arith.muli %83, %c8_i32_15 : i32
    %c8_i32_16 = arith.constant 8 : i32
    %90 = arith.addi %c8_i32_16, %89 : i32
    %91 = tpu.assume_multiple %90, 8 : i32
    %92 = arith.index_cast %91 : i32 to index
    %c0_17 = arith.constant 0 : index
    %93 = vector.load %arg9[%92, %c0_17] : memref<64x128xf32, #tpu.memory_space<vmem>>, vector<8x128xf32>
    %94 = arith.cmpf ogt, %93, %87 : vector<8x128xf32>
    %c1_i32_18 = arith.constant 1 : i32
    %95 = vector.broadcast %c1_i32_18 : i32 to vector<8x128xi32>
    %96 = arith.select %94, %95, %88 : vector<8x128xi1>, vector<8x128xi32>
    %97 = arith.select %94, %93, %87 : vector<8x128xi1>, vector<8x128xf32>
    %98 = arith.addf %87, %93 : vector<8x128xf32>
    %c8_i32_19 = arith.constant 8 : i32
    %99 = arith.muli %83, %c8_i32_19 : i32
    %c16_i32 = arith.constant 16 : i32
    %100 = arith.addi %c16_i32, %99 : i32
    %101 = tpu.assume_multiple %100, 8 : i32
    %102 = arith.index_cast %101 : i32 to index
    %c0_20 = arith.constant 0 : index
    %103 = vector.load %arg9[%102, %c0_20] : memref<64x128xf32, #tpu.memory_space<vmem>>, vector<8x128xf32>
    %104 = arith.cmpf ogt, %103, %97 : vector<8x128xf32>
    %c2_i32 = arith.constant 2 : i32
    %105 = vector.broadcast %c2_i32 : i32 to vector<8x128xi32>
    %106 = arith.select %104, %105, %96 : vector<8x128xi1>, vector<8x128xi32>
    %107 = arith.select %104, %103, %97 : vector<8x128xi1>, vector<8x128xf32>
    %108 = arith.addf %98, %103 : vector<8x128xf32>
    %c8_i32_21 = arith.constant 8 : i32
    %109 = arith.muli %83, %c8_i32_21 : i32
    %c24_i32 = arith.constant 24 : i32
    %110 = arith.addi %c24_i32, %109 : i32
    %111 = tpu.assume_multiple %110, 8 : i32
    %112 = arith.index_cast %111 : i32 to index
    %c0_22 = arith.constant 0 : index
    %113 = vector.load %arg9[%112, %c0_22] : memref<64x128xf32, #tpu.memory_space<vmem>>, vector<8x128xf32>
    %114 = arith.cmpf ogt, %113, %107 : vector<8x128xf32>
    %c3_i32 = arith.constant 3 : i32
    %115 = vector.broadcast %c3_i32 : i32 to vector<8x128xi32>
    %116 = arith.select %114, %115, %106 : vector<8x128xi1>, vector<8x128xi32>
    %117 = arith.select %114, %113, %107 : vector<8x128xi1>, vector<8x128xf32>
    %118 = arith.addf %108, %113 : vector<8x128xf32>
    %c8_i32_23 = arith.constant 8 : i32
    %119 = arith.muli %83, %c8_i32_23 : i32
    %c32_i32 = arith.constant 32 : i32
    %120 = arith.addi %c32_i32, %119 : i32
    %121 = tpu.assume_multiple %120, 8 : i32
    %122 = arith.index_cast %121 : i32 to index
    %c0_24 = arith.constant 0 : index
    %123 = vector.load %arg9[%122, %c0_24] : memref<64x128xf32, #tpu.memory_space<vmem>>, vector<8x128xf32>
    %124 = arith.cmpf ogt, %123, %117 : vector<8x128xf32>
    %c4_i32 = arith.constant 4 : i32
    %125 = vector.broadcast %c4_i32 : i32 to vector<8x128xi32>
    %126 = arith.select %124, %125, %116 : vector<8x128xi1>, vector<8x128xi32>
    %127 = arith.select %124, %123, %117 : vector<8x128xi1>, vector<8x128xf32>
    %128 = arith.addf %118, %123 : vector<8x128xf32>
    %c8_i32_25 = arith.constant 8 : i32
    %129 = arith.muli %83, %c8_i32_25 : i32
    %c40_i32 = arith.constant 40 : i32
    %130 = arith.addi %c40_i32, %129 : i32
    %131 = tpu.assume_multiple %130, 8 : i32
    %132 = arith.index_cast %131 : i32 to index
    %c0_26 = arith.constant 0 : index
    %133 = vector.load %arg9[%132, %c0_26] : memref<64x128xf32, #tpu.memory_space<vmem>>, vector<8x128xf32>
    %134 = arith.cmpf ogt, %133, %127 : vector<8x128xf32>
    %c5_i32 = arith.constant 5 : i32
    %135 = vector.broadcast %c5_i32 : i32 to vector<8x128xi32>
    %136 = arith.select %134, %135, %126 : vector<8x128xi1>, vector<8x128xi32>
    %137 = arith.select %134, %133, %127 : vector<8x128xi1>, vector<8x128xf32>
    %138 = arith.addf %128, %133 : vector<8x128xf32>
    %c8_i32_27 = arith.constant 8 : i32
    %139 = arith.muli %83, %c8_i32_27 : i32
    %c48_i32 = arith.constant 48 : i32
    %140 = arith.addi %c48_i32, %139 : i32
    %141 = tpu.assume_multiple %140, 8 : i32
    %142 = arith.index_cast %141 : i32 to index
    %c0_28 = arith.constant 0 : index
    %143 = vector.load %arg9[%142, %c0_28] : memref<64x128xf32, #tpu.memory_space<vmem>>, vector<8x128xf32>
    %144 = arith.cmpf ogt, %143, %137 : vector<8x128xf32>
    %c6_i32 = arith.constant 6 : i32
    %145 = vector.broadcast %c6_i32 : i32 to vector<8x128xi32>
    %146 = arith.select %144, %145, %136 : vector<8x128xi1>, vector<8x128xi32>
    %147 = arith.select %144, %143, %137 : vector<8x128xi1>, vector<8x128xf32>
    %148 = arith.addf %138, %143 : vector<8x128xf32>
    %c8_i32_29 = arith.constant 8 : i32
    %149 = arith.muli %83, %c8_i32_29 : i32
    %c56_i32 = arith.constant 56 : i32
    %150 = arith.addi %c56_i32, %149 : i32
    %151 = tpu.assume_multiple %150, 8 : i32
    %152 = arith.index_cast %151 : i32 to index
    %c0_30 = arith.constant 0 : index
    %153 = vector.load %arg9[%152, %c0_30] : memref<64x128xf32, #tpu.memory_space<vmem>>, vector<8x128xf32>
    %154 = arith.cmpf ogt, %153, %147 : vector<8x128xf32>
    %c7_i32 = arith.constant 7 : i32
    %155 = vector.broadcast %c7_i32 : i32 to vector<8x128xi32>
    %156 = arith.select %154, %155, %146 : vector<8x128xi1>, vector<8x128xi32>
    %157 = arith.select %154, %153, %147 : vector<8x128xi1>, vector<8x128xf32>
    %158 = arith.addf %148, %153 : vector<8x128xf32>
    %159 = arith.index_cast %85 : i32 to index
    %c0_31 = arith.constant 0 : index
    %160 = vector.load %arg3[%159, %c0_31] : memref<8x2xf32, #tpu.memory_space<vmem>>, vector<8x2xf32>
    %161 = vector.extract_strided_slice %160 {offsets = [0, 0], sizes = [8, 1], strides = [1, 1]} : vector<8x2xf32> to vector<8x1xf32>
    %162 = vector.broadcast %161 : vector<8x1xf32> to vector<8x128xf32>
    %163 = vector.broadcast %79 : vector<1x128xf32> to vector<8x128xf32>
    %164 = arith.mulf %162, %163 : vector<8x128xf32>
    %165 = vector.extract_strided_slice %160 {offsets = [0, 1], sizes = [8, 1], strides = [1, 1]} : vector<8x2xf32> to vector<8x1xf32>
    %166 = vector.broadcast %165 : vector<8x1xf32> to vector<8x128xf32>
    %167 = vector.broadcast %80 : vector<1x128xf32> to vector<8x128xf32>
    %168 = arith.mulf %166, %167 : vector<8x128xf32>
    %169 = arith.addf %164, %168 : vector<8x128xf32>
    %170 = vector.broadcast %81 : vector<1x128xf32> to vector<8x128xf32>
    %171 = arith.addf %169, %170 : vector<8x128xf32>
    %172 = arith.addf %157, %171 : vector<8x128xf32>
    %173 = arith.index_cast %85 : i32 to index
    %c0_32 = arith.constant 0 : index
    %174 = vector.load %arg7[%173, %c0_32] : memref<8x384xf32, #tpu.memory_space<vmem>>, vector<8x128xf32>
    tpu.vector_store %arg7[%173, %c0_32], %172 {strides = array<i32>} : memref<8x384xf32, #tpu.memory_space<vmem>>, vector<8x128xf32>,
    %cst_33 = arith.constant 1.250000e-01 : f32
    %175 = vector.broadcast %cst_33 : f32 to vector<8x128xf32>
    %176 = arith.mulf %158, %175 : vector<8x128xf32>
    %177 = arith.addf %176, %171 : vector<8x128xf32>
    %178 = arith.index_cast %85 : i32 to index
    %c128 = arith.constant 128 : index
    %179 = vector.load %arg7[%178, %c128] : memref<8x384xf32, #tpu.memory_space<vmem>>, vector<8x128xf32>
    tpu.vector_store %arg7[%178, %c128], %177 {strides = array<i32>} : memref<8x384xf32, #tpu.memory_space<vmem>>, vector<8x128xf32>,
    %cst_34 = arith.constant 8.000000e+00 : f32
    %180 = vector.broadcast %cst_34 : f32 to vector<8x128xf32>
    %181 = arith.mulf %180, %171 : vector<8x128xf32>
    %182 = arith.addf %158, %181 : vector<8x128xf32>
    %183 = arith.index_cast %85 : i32 to index
    %c256 = arith.constant 256 : index
    %184 = vector.load %arg7[%183, %c256] : memref<8x384xf32, #tpu.memory_space<vmem>>, vector<8x128xf32>
    tpu.vector_store %arg7[%183, %c256], %182 {strides = array<i32>} : memref<8x384xf32, #tpu.memory_space<vmem>>, vector<8x128xf32>,
    %185 = arith.index_cast %85 : i32 to index
    %c0_35 = arith.constant 0 : index
    %186 = vector.load %arg8[%185, %c0_35] : memref<8x128xi32, #tpu.memory_space<vmem>>, vector<8x128xi32>
    tpu.vector_store %arg8[%185, %c0_35], %156 {strides = array<i32>} : memref<8x128xi32, #tpu.memory_space<vmem>>, vector<8x128xi32>,
    %c1_i32_36 = arith.constant 1 : i32
    return
  }
  func.func @transform_0(%arg0: i32) -> (i32, i32) {
    %c0_i32 = arith.constant 0 : i32
    %c0_i32_0 = arith.constant 0 : i32
    return %arg0, %c0_i32 : i32, i32
  }
  func.func @transform_1(%arg0: i32) -> (i32, i32) {
    %c0_i32 = arith.constant 0 : i32
    %c0_i32_0 = arith.constant 0 : i32
    return %arg0, %c0_i32 : i32, i32
  }
  func.func @transform_2(%arg0: i32) -> (i32, i32) {
    %c0_i32 = arith.constant 0 : i32
    %c0_i32_0 = arith.constant 0 : i32
    return %arg0, %c0_i32 : i32, i32
  }
  func.func @transform_3(%arg0: i32) -> (i32, i32) {
    %c0_i32 = arith.constant 0 : i32
    %c0_i32_0 = arith.constant 0 : i32
    %c0_i32_1 = arith.constant 0 : i32
    return %c0_i32, %c0_i32_0 : i32, i32
  }
  func.func @transform_4(%arg0: i32) -> (i32, i32) {
    %c0_i32 = arith.constant 0 : i32
    %c0_i32_0 = arith.constant 0 : i32
    %c0_i32_1 = arith.constant 0 : i32
    return %c0_i32, %c0_i32_0 : i32, i32
  }
  func.func @transform_5(%arg0: i32) -> (i32, i32) {
    %c0_i32 = arith.constant 0 : i32
    %c0_i32_0 = arith.constant 0 : i32
    %c0_i32_1 = arith.constant 0 : i32
    return %c0_i32, %c0_i32_0 : i32, i32
  }
  func.func @transform_6(%arg0: i32) -> (i32, i32) {
    %c0_i32 = arith.constant 0 : i32
    %c0_i32_0 = arith.constant 0 : i32
    return %arg0, %c0_i32 : i32, i32
  }
  func.func @transform_7(%arg0: i32) -> (i32, i32) {
    %c0_i32 = arith.constant 0 : i32
    %c0_i32_0 = arith.constant 0 : i32
    return %arg0, %c0_i32 : i32, i32
  }
}

</mosaic_0001>

<llo_original>
// kernel: tpu_custom_call.1
$region0: #{tpu_custom_call.1}
  #allocation0 [shape = 'u32[]', space=smem, size = 0x4, offset = 0x4, fixed_abs, tag = 'smem constant byte address 0x4 - core index']
  #allocation1 [shape = 'u32[144,128]{1,0:T(1,128)}', space=vmem, size = 0x12000, scoped, tag = 'internal scratch']
  #allocation2 [shape = 'f32[64,128]{1,0:T(8,128)}', space=vmem, size = 0x8000, scoped, tag = 'scratch operand']
  %s0 = inlined_call_operand.vmem [shape: s32[16,8], index: 0, kind: input, shape index: {}]
  %s1 = inlined_call_operand.vmem [shape: s32[16,8], index: 1, kind: input, shape index: {}]
  %s2 = inlined_call_operand.vmem [shape: f32[16,2], index: 2, kind: input, shape index: {}]
  %s3 = inlined_call_operand.vmem [shape: f32[48,128], index: 3, kind: input, shape index: {}]
  %s4 = inlined_call_operand.vmem [shape: f32[8,128], index: 4, kind: input, shape index: {}]
  %s5 = inlined_call_operand.vmem [shape: f32[1,128], index: 5, kind: input, shape index: {}]
  %s6 = inlined_call_operand.hbm [shape: f32[16,384], index: 6, kind: output, shape index: {0}]
  %s7 = inlined_call_operand.hbm [shape: s32[16,128], index: 7, kind: output, shape index: {1}]
  %8 = xla_tuple %s6, %s7
  %s9 = sld [smem:[#allocation0]]
  $region65: #{tpu_custom_call.1} parent=0
    _
  %s11 = ssub.s32 1, %s9
  %s12 = scalar_select 0, %s11, %s9
  $region1: #{tpu_custom_call.1} parent=0
    #allocation3 [shape = 'u8[24576]{0}', space=vmem, size = 0x6000, scoped, tag = 'output window, operand 0']
    #allocation4 [shape = 's32[2]{0}', space=sflag, size = 0x8, scoped, tag = 'scoped memory for tpu_custom_call.1']
    #allocation5 [shape = 'u8[8192]{0}', space=vmem, size = 0x2000, scoped, tag = 'output window, operand 1']
    #allocation6 [shape = 's32[2]{0}', space=sflag, size = 0x8, scoped, tag = 'scoped memory for tpu_custom_call.1']
    %13 = vsyncpa [#allocation4], 0
    %s14 = scalar_lea.sflag [#allocation4], 1
    %15 = vsyncpa %s14, 0
    %16 = vsyncpa [#allocation6], 0
    %s17 = scalar_lea.sflag [#allocation6], 1
    %18 = vsyncpa %s17, 0
    loop: start=0, step=1, limit=4
    $region2: #{tpu_custom_call.1} parent=1 // loop_pre_header
      _
    $region3: #{tpu_custom_call.1} parent=1 // loop_header
      %s20 = sphi 0, %s24
      %p21 = scmp.ge.s32.totalorder %s20, 4
      %s30 = sphi 0, %s32
      %s33 = sphi 0, %s30
      %s34 = sphi 0, %s33
      %s50 = sphi 0, %s34
      %s56 = sphi 0, %s58
      %s59 = sphi 0, %s56
      %s60 = sphi 0, %s59
      %s76 = sphi 0, %s60
      %s82 = sphi 0, %s84
      %s85 = sphi 0, %s82
      %s86 = sphi 0, %s85
      %s102 = sphi 0, %s86
      %s106 = sphi 0, %s106
      %s108 = sphi 0, %s106
      %s109 = sphi 0, %s108
      %s123 = sphi 0, %s109
      %s127 = sphi 0, %s127
      %s129 = sphi 0, %s127
      %s130 = sphi 0, %s129
      %s144 = sphi 0, %s130
      %s148 = sphi 0, %s148
      %s150 = sphi 0, %s148
      %s151 = sphi 0, %s150
      %s165 = sphi 0, %s151
      %s171 = sphi 0, %s173
      %s174 = sphi 0, %s171
      %s175 = sphi 0, %s174
      %s191 = sphi 0, %s175
      %s197 = sphi 0, %s199
      %s200 = sphi 0, %s197
      %s201 = sphi 0, %s200
      %s217 = sphi 0, %s201
    $region4: #{tpu_custom_call.1} parent=1 // loop_header_branch
      %23 = sbr.rel (%p21) target = $region8
    $region5: #{tpu_custom_call.1} parent=1 // loop_body
      %s25 = ssub.s32 %s20, 1
      %s26 = ssub.s32 %s20, 2
      %s27 = sadd.s32 %s20, 1
      %s28 = ssub.s32 %s20, %s27
      %p29 = scmp.eq.s32.totalorder %s28, 0
      %s31 = sadd.s32 %s30, 1
      %s32 = scalar_select %p29, %s30, %s31
      %p35 = pneg %p29
      %p36 = scmp.eq.s32.totalorder %s20, 1
      %p37 = por %p35, %p36
      %p38 = scmp.ne.s32.totalorder %s30, %s33
      %p39 = scmp.eq.s32.totalorder %s20, 0
      %p40 = por %p38, %p39
      %p41 = scmp.ne.s32.totalorder %s30, %s33
      %p42 = scmp.eq.s32.totalorder %s25, 1
      %p43 = por %p41, %p42
      %p44 = scmp.ne.s32.totalorder %s33, %s34
      %p45 = scmp.eq.s32.totalorder %s25, 0
      %p46 = por %p44, %p45
      %p47 = scmp.ne.s32.totalorder %s33, %s34
      %p48 = scmp.eq.s32.totalorder %s26, 1
      %p49 = por %p47, %p48
      %p51 = scmp.ne.s32.totalorder %s34, %s50
      %p52 = scmp.eq.s32.totalorder %s26, 0
      %p53 = por %p51, %p52
      %s54 = ssub.s32 %s20, %s27
      %p55 = scmp.eq.s32.totalorder %s54, 0
      %s57 = sadd.s32 %s56, 1
      %s58 = scalar_select %p55, %s56, %s57
      %p61 = pneg %p55
      %p62 = scmp.eq.s32.totalorder %s20, 1
      %p63 = por %p61, %p62
      %p64 = scmp.ne.s32.totalorder %s56, %s59
      %p65 = scmp.eq.s32.totalorder %s20, 0
      %p66 = por %p64, %p65
      %p67 = scmp.ne.s32.totalorder %s56, %s59
      %p68 = scmp.eq.s32.totalorder %s25, 1
      %p69 = por %p67, %p68
      %p70 = scmp.ne.s32.totalorder %s59, %s60
      %p71 = scmp.eq.s32.totalorder %s25, 0
      %p72 = por %p70, %p71
      %p73 = scmp.ne.s32.totalorder %s59, %s60
      %p74 = scmp.eq.s32.totalorder %s26, 1
      %p75 = por %p73, %p74
      %p77 = scmp.ne.s32.totalorder %s60, %s76
      %p78 = scmp.eq.s32.totalorder %s26, 0
      %p79 = por %p77, %p78
      %s80 = ssub.s32 %s20, %s27
      %p81 = scmp.eq.s32.totalorder %s80, 0
      %s83 = sadd.s32 %s82, 1
      %s84 = scalar_select %p81, %s82, %s83
      %p87 = pneg %p81
      %p88 = scmp.eq.s32.totalorder %s20, 1
      %p89 = por %p87, %p88
      %p90 = scmp.ne.s32.totalorder %s82, %s85
      %p91 = scmp.eq.s32.totalorder %s20, 0
      %p92 = por %p90, %p91
      %p93 = scmp.ne.s32.totalorder %s82, %s85
      %p94 = scmp.eq.s32.totalorder %s25, 1
      %p95 = por %p93, %p94
      %p96 = scmp.ne.s32.totalorder %s85, %s86
      %p97 = scmp.eq.s32.totalorder %s25, 0
      %p98 = por %p96, %p97
      %p99 = scmp.ne.s32.totalorder %s85, %s86
      %p100 = scmp.eq.s32.totalorder %s26, 1
      %p101 = por %p99, %p100
      %p103 = scmp.ne.s32.totalorder %s86, %s102
      %p104 = scmp.eq.s32.totalorder %s26, 0
      %p105 = por %p103, %p104
      %s107 = sadd.s32 %s106, 1
      %p110 = scmp.eq.s32.totalorder %s20, 1
      %p111 = scmp.ne.s32.totalorder %s106, %s108
      %p112 = scmp.eq.s32.totalorder %s20, 0
      %p113 = por %p111, %p112
      %p114 = scmp.ne.s32.totalorder %s106, %s108
      %p115 = scmp.eq.s32.totalorder %s25, 1
      %p116 = por %p114, %p115
      %p117 = scmp.ne.s32.totalorder %s108, %s109
      %p118 = scmp.eq.s32.totalorder %s25, 0
      %p119 = por %p117, %p118
      %p120 = scmp.ne.s32.totalorder %s108, %s109
      %p121 = scmp.eq.s32.totalorder %s26, 1
      %p122 = por %p120, %p121
      %p124 = scmp.ne.s32.totalorder %s109, %s123
      %p125 = scmp.eq.s32.totalorder %s26, 0
      %p126 = por %p124, %p125
      %s128 = sadd.s32 %s127, 1
      %p131 = scmp.eq.s32.totalorder %s20, 1
      %p132 = scmp.ne.s32.totalorder %s127, %s129
      %p133 = scmp.eq.s32.totalorder %s20, 0
      %p134 = por %p132, %p133
      %p135 = scmp.ne.s32.totalorder %s127, %s129
      %p136 = scmp.eq.s32.totalorder %s25, 1
      %p137 = por %p135, %p136
      %p138 = scmp.ne.s32.totalorder %s129, %s130
      %p139 = scmp.eq.s32.totalorder %s25, 0
      %p140 = por %p138, %p139
      %p141 = scmp.ne.s32.totalorder %s129, %s130
      %p142 = scmp.eq.s32.totalorder %s26, 1
      %p143 = por %p141, %p142
      %p145 = scmp.ne.s32.totalorder %s130, %s144
      %p146 = scmp.eq.s32.totalorder %s26, 0
      %p147 = por %p145, %p146
      %s149 = sadd.s32 %s148, 1
      %p152 = scmp.eq.s32.totalorder %s20, 1
      %p153 = scmp.ne.s32.totalorder %s148, %s150
      %p154 = scmp.eq.s32.totalorder %s20, 0
      %p155 = por %p153, %p154
      %p156 = scmp.ne.s32.totalorder %s148, %s150
      %p157 = scmp.eq.s32.totalorder %s25, 1
      %p158 = por %p156, %p157
      %p159 = scmp.ne.s32.totalorder %s150, %s151
      %p160 = scmp.eq.s32.totalorder %s25, 0
      %p161 = por %p159, %p160
      %p162 = scmp.ne.s32.totalorder %s150, %s151
      %p163 = scmp.eq.s32.totalorder %s26, 1
      %p164 = por %p162, %p163
      %p166 = scmp.ne.s32.totalorder %s151, %s165
      %p167 = scmp.eq.s32.totalorder %s26, 0
      %p168 = por %p166, %p167
      %s169 = ssub.s32 %s20, %s27
      %p170 = scmp.eq.s32.totalorder %s169, 0
      %s172 = sadd.s32 %s171, 1
      %s173 = scalar_select %p170, %s171, %s172
      %p176 = pneg %p170
      %p177 = scmp.eq.s32.totalorder %s20, 1
      %p178 = por %p176, %p177
      %p179 = scmp.ne.s32.totalorder %s171, %s174
      %p180 = scmp.eq.s32.totalorder %s20, 0
      %p181 = por %p179, %p180
      %p182 = scmp.ne.s32.totalorder %s171, %s174
      %p183 = scmp.eq.s32.totalorder %s25, 1
      %p184 = por %p182, %p183
      %p185 = scmp.ne.s32.totalorder %s174, %s175
      %p186 = scmp.eq.s32.totalorder %s25, 0
      %p187 = por %p185, %p186
      %p188 = scmp.ne.s32.totalorder %s174, %s175
      %p189 = scmp.eq.s32.totalorder %s26, 1
      %p190 = por %p188, %p189
      %p192 = scmp.ne.s32.totalorder %s175, %s191
      %p193 = scmp.eq.s32.totalorder %s26, 0
      %p194 = por %p192, %p193
      %s195 = ssub.s32 %s20, %s27
      %p196 = scmp.eq.s32.totalorder %s195, 0
      %s198 = sadd.s32 %s197, 1
      %s199 = scalar_select %p196, %s197, %s198
      %p202 = pneg %p196
      %p203 = scmp.eq.s32.totalorder %s20, 1
      %p204 = por %p202, %p203
      %p205 = scmp.ne.s32.totalorder %s197, %s200
      %p206 = scmp.eq.s32.totalorder %s20, 0
      %p207 = por %p205, %p206
      %p208 = scmp.ne.s32.totalorder %s197, %s200
      %p209 = scmp.eq.s32.totalorder %s25, 1
      %p210 = por %p208, %p209
      %p211 = scmp.ne.s32.totalorder %s200, %s201
      %p212 = scmp.eq.s32.totalorder %s25, 0
      %p213 = por %p211, %p212
      %p214 = scmp.ne.s32.totalorder %s200, %s201
      %p215 = scmp.eq.s32.totalorder %s26, 1
      %p216 = por %p214, %p215
      %p218 = scmp.ne.s32.totalorder %s201, %s217
      %p219 = scmp.eq.s32.totalorder %s26, 0
      %p220 = por %p218, %p219
      %p221 = scmp.le.s32.totalorder 1, %s20
      %p222 = scmp.lt.s32.totalorder %s20, 3
      %p223 = pnand %p221, %p222
      %p224 = pneg %p223
      // Predicated region
      $region9: #{tpu_custom_call.1} parent=5 // pred_check
        _
      $region10: #{tpu_custom_call.1} parent=5 // pred_check_branch
        %226 = sbr.rel (%p223) target = $region12
      $region11: #{tpu_custom_call.1} parent=5 // pred_region
        %s227 = ssub.s32 %s20, 1
        // Predicated region
        $region13: #{tpu_custom_call.1} parent=11 // pred_check
          %p228 = pneg %p119
        $region14: #{tpu_custom_call.1} parent=11 // pred_check_branch
          %230 = sbr.rel (%p228) target = $region16
        $region15: #{tpu_custom_call.1} parent=11 // pred_region
          _
        $region16: #{tpu_custom_call.1} parent=11 // pred_fallthru
          _
        // Predicated region
        $region17: #{tpu_custom_call.1} parent=11 // pred_check
          %p231 = pneg %p140
        $region18: #{tpu_custom_call.1} parent=11 // pred_check_branch
          %233 = sbr.rel (%p231) target = $region20
        $region19: #{tpu_custom_call.1} parent=11 // pred_region
          _
        $region20: #{tpu_custom_call.1} parent=11 // pred_fallthru
          _
        // Predicated region
        $region21: #{tpu_custom_call.1} parent=11 // pred_check
          %p234 = pneg %p161
        $region22: #{tpu_custom_call.1} parent=11 // pred_check_branch
          %236 = sbr.rel (%p234) target = $region24
        $region23: #{tpu_custom_call.1} parent=11 // pred_region
          _
        $region24: #{tpu_custom_call.1} parent=11 // pred_fallthru
          _
      $region12: #{tpu_custom_call.1} parent=5 // pred_fallthru
        _
      %p237 = scmp.lt.s32.totalorder %s20, 2
      // Predicated region
      $region25: #{tpu_custom_call.1} parent=5 // pred_check
        %p238 = pneg %p237
      $region26: #{tpu_custom_call.1} parent=5 // pred_check_branch
        %240 = sbr.rel (%p238) target = $region28
      $region27: #{tpu_custom_call.1} parent=5 // pred_region
        // Predicated region
        $region29: #{tpu_custom_call.1} parent=27 // pred_check
          %p241 = pneg %p40
        $region30: #{tpu_custom_call.1} parent=27 // pred_check_branch
          %243 = sbr.rel (%p241) target = $region32
        $region31: #{tpu_custom_call.1} parent=27 // pred_region
          %p244 = scmp.lt.s32.totalorder %s20, 1
          %s245 = scalar_select %p244, %s20, 1
          %s246 = smul.addr %s245, 8
          %s247 = scalar_lea.vmem %s0, %s246
        $region32: #{tpu_custom_call.1} parent=27 // pred_fallthru
          _
        // Predicated region
        $region33: #{tpu_custom_call.1} parent=27 // pred_check
          %p248 = pneg %p66
        $region34: #{tpu_custom_call.1} parent=27 // pred_check_branch
          %250 = sbr.rel (%p248) target = $region36
        $region35: #{tpu_custom_call.1} parent=27 // pred_region
          %p251 = scmp.lt.s32.totalorder %s20, 1
          %s252 = scalar_select %p251, %s20, 1
          %s253 = smul.addr %s252, 8
          %s254 = scalar_lea.vmem %s1, %s253
        $region36: #{tpu_custom_call.1} parent=27 // pred_fallthru
          _
        // Predicated region
        $region37: #{tpu_custom_call.1} parent=27 // pred_check
          %p255 = pneg %p92
        $region38: #{tpu_custom_call.1} parent=27 // pred_check_branch
          %257 = sbr.rel (%p255) target = $region40
        $region39: #{tpu_custom_call.1} parent=27 // pred_region
          %p258 = scmp.lt.s32.totalorder %s20, 1
          %s259 = scalar_select %p258, %s20, 1
          %s260 = smul.addr %s259, 8
          %s261 = scalar_lea.vmem %s2, %s260
        $region40: #{tpu_custom_call.1} parent=27 // pred_fallthru
          _
      $region28: #{tpu_custom_call.1} parent=5 // pred_fallthru
        _
      %p262 = scmp.le.s32.totalorder 1, %s20
      %p263 = scmp.lt.s32.totalorder %s20, 3
      %p264 = pnand %p262, %p263
      %p265 = pneg %p264
      // Predicated region
      $region41: #{tpu_custom_call.1} parent=5 // pred_check
        _
      $region42: #{tpu_custom_call.1} parent=5 // pred_check_branch
        %267 = sbr.rel (%p264) target = $region44
      $region43: #{tpu_custom_call.1} parent=5 // pred_region
        %s268 = ssub.s32 %s20, 1
        %p269 = scmp.lt.s32.totalorder %s25, 1
        %s270 = scalar_select %p269, %s25, 1
        %s271 = smul.addr %s270, 8
        %s272 = scalar_lea.vmem %s0, %s271
        %p273 = pneg %p46
        %p274 = pneg %p43
        %p275 = scmp.lt.s32.totalorder %s25, 1
        %s276 = scalar_select %p275, %s25, 1
        %s277 = smul.addr %s276, 8
        %s278 = scalar_lea.vmem %s1, %s277
        %p279 = pneg %p72
        %p280 = pneg %p69
        %p281 = scmp.lt.s32.totalorder %s25, 1
        %s282 = scalar_select %p281, %s25, 1
        %s283 = smul.addr %s282, 8
        %s284 = scalar_lea.vmem %s2, %s283
        %p285 = pneg %p98
        %p286 = pneg %p95
        %p287 = pneg %p119
        %p288 = pneg %p116
        %p289 = pneg %p140
        %p290 = pneg %p137
        %p291 = pneg %p161
        %p292 = pneg %p158
        %p293 = pneg %p187
        %p294 = pneg %p184
        %s295 = sand.u32 %s174, 1
        %s296 = scalar_lea.sflag [#allocation4], %s295
        %s297 = sand.u32 %s174, 1
        %s298 = smul.addr %s297, 24
        %s299 = scalar_lea.vmem [#allocation3], %s298
        %p300 = pneg %p213
        %p301 = pneg %p210
        %s302 = sand.u32 %s200, 1
        %s303 = scalar_lea.sflag [#allocation6], %s302
        %s304 = sand.u32 %s200, 1
        %s305 = smul.addr %s304, 8
        %s306 = scalar_lea.vmem [#allocation5], %s305
        %p307 = scmp.lt.s32.totalorder %s25, 1
        %s308 = scalar_select %p307, %s25, 1
        %s309 = smul.addr %s308, 8
        %s310 = scalar_lea.vmem %s0, %s309
        %p311 = scmp.lt.s32.totalorder %s25, 1
        %s312 = scalar_select %p311, %s25, 1
        %s313 = smul.addr %s312, 8
        %s314 = scalar_lea.vmem %s1, %s313
        %p315 = scmp.lt.s32.totalorder %s25, 1
        %s316 = scalar_select %p315, %s25, 1
        %s317 = smul.addr %s316, 8
        %s318 = scalar_lea.vmem %s2, %s317
        %v319 = vld [vmem:[%s310] sm:$0xff]
        %v320 = vld [vmem:[%s314] sm:$0xff]
        %v321 = vlaneseq
        %v322 = vand.u32 %v321, 127
        %323 = vset.pattern.permute.xlu0 0
        %324 = vperm.xlu0 %323, %v319
        %v325 = vpop.permute.xlu0 %324
        %vm326 = vcmp.eq.s32.totalorder %v325, %v322
        %327 = vset.pattern.permute.xlu0 0
        %328 = vperm.xlu0 %327, %v320
        %v329 = vpop.permute.xlu0 %328
        %vm330 = vcmp.eq.s32.totalorder %v329, %v322
        %vm331 = vmor %vm326, %vm330
        %v332 = vsel %vm331, 1, 0
        %v333 = vcvt.s32.f32 %v332
        %334 = vset.pattern.permute.xlu0 1
        %335 = vperm.xlu0 %334, %v319
        %v336 = vpop.permute.xlu0 %335
        %vm337 = vcmp.eq.s32.totalorder %v336, %v322
        %338 = vset.pattern.permute.xlu0 1
        %339 = vperm.xlu0 %338, %v320
        %v340 = vpop.permute.xlu0 %339
        %vm341 = vcmp.eq.s32.totalorder %v340, %v322
        %vm342 = vmor %vm337, %vm341
        %v343 = vsel %vm342, 1, 0
        %v344 = vcvt.s32.f32 %v343
        %345 = vset.pattern.permute.xlu0 2
        %346 = vperm.xlu0 %345, %v319
        %v347 = vpop.permute.xlu0 %346
        %vm348 = vcmp.eq.s32.totalorder %v347, %v322
        %349 = vset.pattern.permute.xlu0 2
        %350 = vperm.xlu0 %349, %v320
        %v351 = vpop.permute.xlu0 %350
        %vm352 = vcmp.eq.s32.totalorder %v351, %v322
        %vm353 = vmor %vm348, %vm352
        %v354 = vsel %vm353, 1, 0
        %v355 = vcvt.s32.f32 %v354
        %356 = vset.pattern.permute.xlu0 3
        %357 = vperm.xlu0 %356, %v319
        %v358 = vpop.permute.xlu0 %357
        %vm359 = vcmp.eq.s32.totalorder %v358, %v322
        %360 = vset.pattern.permute.xlu0 3
        %361 = vperm.xlu0 %360, %v320
        %v362 = vpop.permute.xlu0 %361
        %vm363 = vcmp.eq.s32.totalorder %v362, %v322
        %vm364 = vmor %vm359, %vm363
        %v365 = vsel %vm364, 1, 0
        %v366 = vcvt.s32.f32 %v365
        %367 = vset.pattern.permute.xlu0 4
        %368 = vperm.xlu0 %367, %v319
        %v369 = vpop.permute.xlu0 %368
        %vm370 = vcmp.eq.s32.totalorder %v369, %v322
        %371 = vset.pattern.permute.xlu0 4
        %372 = vperm.xlu0 %371, %v320
        %v373 = vpop.permute.xlu0 %372
        %vm374 = vcmp.eq.s32.totalorder %v373, %v322
        %vm375 = vmor %vm370, %vm374
        %v376 = vsel %vm375, 1, 0
        %v377 = vcvt.s32.f32 %v376
        %378 = vset.pattern.permute.xlu0 5
        %379 = vperm.xlu0 %378, %v319
        %v380 = vpop.permute.xlu0 %379
        %vm381 = vcmp.eq.s32.totalorder %v380, %v322
        %382 = vset.pattern.permute.xlu0 5
        %383 = vperm.xlu0 %382, %v320
        %v384 = vpop.permute.xlu0 %383
        %vm385 = vcmp.eq.s32.totalorder %v384, %v322
        %vm386 = vmor %vm381, %vm385
        %v387 = vsel %vm386, 1, 0
        %v388 = vcvt.s32.f32 %v387
        %389 = vset.pattern.permute.xlu0 6
        %390 = vperm.xlu0 %389, %v319
        %v391 = vpop.permute.xlu0 %390
        %vm392 = vcmp.eq.s32.totalorder %v391, %v322
        %393 = vset.pattern.permute.xlu0 6
        %394 = vperm.xlu0 %393, %v320
        %v395 = vpop.permute.xlu0 %394
        %vm396 = vcmp.eq.s32.totalorder %v395, %v322
        %vm397 = vmor %vm392, %vm396
        %v398 = vsel %vm397, 1, 0
        %v399 = vcvt.s32.f32 %v398
        %400 = vset.pattern.permute.xlu0 7
        %401 = vperm.xlu0 %400, %v319
        %v402 = vpop.permute.xlu0 %401
        %vm403 = vcmp.eq.s32.totalorder %v402, %v322
        %404 = vset.pattern.permute.xlu0 7
        %405 = vperm.xlu0 %404, %v320
        %v406 = vpop.permute.xlu0 %405
        %vm407 = vcmp.eq.s32.totalorder %v406, %v322
        %vm408 = vmor %vm403, %vm407
        %v409 = vsel %vm408, 1, 0
        %v410 = vcvt.s32.f32 %v409
        %v411 = vld [vmem:[%s3] sm:$0xff]
        %v412 = vld [vmem:[%s3 + $0x8] sm:$0xff]
        %v413 = vld [vmem:[%s3 + $0x10] sm:$0xff]
        %v414 = vld [vmem:[%s3 + $0x18] sm:$0xff]
        %v415 = vld [vmem:[%s3 + $0x20] sm:$0xff]
        %v416 = vld [vmem:[%s3 + $0x28] sm:$0xff]
        %vm417 = vcmask 392192
        %v419 = vsel %vm417, %v333, 0
        %v422 = vsel %vm417, %v344, 0
        %v425 = vsel %vm417, %v355, 0
        %v428 = vsel %vm417, %v366, 0
        %v431 = vsel %vm417, %v377, 0
        %v434 = vsel %vm417, %v388, 0
        %v437 = vsel %vm417, %v399, 0
        %v440 = vsel %vm417, %v410, 0
        %442 = vmatprep.subr.mxu0 0.0
        %443 = vmatpush1.msra.mxu0 0.0
        %444 = vmatprep.subr.mxu0 0.0
        %445 = vmatpush1.msra.mxu0 0.0
        %446 = vmatprep.subr.mxu0 0.0
        %447 = vmatpush1.msra.mxu0 0.0
        %448 = vmatprep.subr.mxu0 0.0
        %449 = vmatpush1.msra.mxu0 0.0
        %450 = vmatprep.subr.mxu0 0.0
        %451 = vmatpush1.msra.mxu0 0.0
        %452 = vmatprep.subr.mxu0 0.0
        %453 = vmatpush1.msra.mxu0 0.0
        %454 = vmatprep.subr.mxu0 0.0
        %455 = vmatpush1.msra.mxu0 0.0
        %456 = vmatprep.subr.mxu0 0.0
        %457 = vmatpush1.msra.mxu0 0.0
        %458 = vmatprep.subr.mxu0 0.0
        %459 = vmatpush1.msra.mxu0 0.0
        %460 = vmatprep.subr.mxu0 0.0
        %461 = vmatpush1.msra.mxu0 0.0
        %462 = vmatprep.subr.mxu0 0.0
        %463 = vmatpush1.msra.mxu0 %v416
        %464 = vmatprep.subr.mxu0 0.0
        %465 = vmatpush1.msra.mxu0 %v415
        %466 = vmatprep.subr.mxu0 0.0
        %467 = vmatpush1.msra.mxu0 %v414
        %468 = vmatprep.subr.mxu0 0.0
        %469 = vmatpush1.msra.mxu0 %v413
        %470 = vmatprep.subr.mxu0 0.0
        %471 = vmatpush1.msra.mxu0 %v412
        %472 = vmatprep.subr.mxu0 0.0
        %473 = vmatpush1.msra.mxu0 %v411
        %474 = vmatprep.subr.mxu0 0.0
        %475 = vmatpush2.msra.mxu0 0.0
        %476 = vmatprep.subr.mxu0 0.0
        %477 = vmatpush2.msra.mxu0 0.0
        %478 = vmatprep.subr.mxu0 0.0
        %479 = vmatpush2.msra.mxu0 0.0
        %480 = vmatprep.subr.mxu0 0.0
        %481 = vmatpush2.msra.mxu0 0.0
        %482 = vmatprep.subr.mxu0 0.0
        %483 = vmatpush2.msra.mxu0 0.0
        %484 = vmatprep.subr.mxu0 0.0
        %485 = vmatpush2.msra.mxu0 0.0
        %486 = vmatprep.subr.mxu0 0.0
        %487 = vmatpush2.msra.mxu0 0.0
        %488 = vmatprep.subr.mxu0 0.0
        %489 = vmatpush2.msra.mxu0 0.0
        %490 = vmatprep.subr.mxu0 0.0
        %491 = vmatpush2.msra.mxu0 0.0
        %492 = vmatprep.subr.mxu0 0.0
        %493 = vmatpush2.msra.mxu0 0.0
        %494 = vmatprep.subr.mxu0 0.0
        %495 = vmatpush2.msra.mxu0 0.0
        %496 = vmatprep.subr.mxu0 0.0
        %497 = vmatpush2.msra.mxu0 0.0
        %498 = vmatprep.subr.mxu0 0.0
        %499 = vmatpush2.msra.mxu0 0.0
        %500 = vmatprep.subr.mxu0 0.0
        %501 = vmatpush2.msra.mxu0 0.0
        %502 = vmatprep.subr.mxu0 0.0
        %503 = vmatpush2.msra.mxu0 0.0
        %504 = vmatprep.subr.mxu0 0.0
        %505 = vmatpush2.msra.mxu0 0.0
        %506 = vmatprep.mubr.f32.mxu0 0.0
        %507 = vmatmul.mubr.f32.gmra.mxu0 %v419
        %v508 = vpop.f32.mrf.mxu0
        %v509 = vadd.f32 0.0, %v508
        %v510 = vpop.f32.mrf.mxu0
        %511 = vmatprep.mubr.f32.mxu0 0.0
        %512 = vmatmul.mubr.f32.gmra.mxu0 %v422
        %v513 = vpop.f32.mrf.mxu0
        %v514 = vadd.f32 0.0, %v513
        %v515 = vpop.f32.mrf.mxu0
        %516 = vmatprep.mubr.f32.mxu0 0.0
        %517 = vmatmul.mubr.f32.gmra.mxu0 %v425
        %v518 = vpop.f32.mrf.mxu0
        %v519 = vadd.f32 0.0, %v518
        %v520 = vpop.f32.mrf.mxu0
        %521 = vmatprep.mubr.f32.mxu0 0.0
        %522 = vmatmul.mubr.f32.gmra.mxu0 %v428
        %v523 = vpop.f32.mrf.mxu0
        %v524 = vadd.f32 0.0, %v523
        %v525 = vpop.f32.mrf.mxu0
        %526 = vmatprep.mubr.f32.mxu0 0.0
        %527 = vmatmul.mubr.f32.gmra.mxu0 %v431
        %v528 = vpop.f32.mrf.mxu0
        %v529 = vadd.f32 0.0, %v528
        %v530 = vpop.f32.mrf.mxu0
        %531 = vmatprep.mubr.f32.mxu0 0.0
        %532 = vmatmul.mubr.f32.gmra.mxu0 %v434
        %v533 = vpop.f32.mrf.mxu0
        %v534 = vadd.f32 0.0, %v533
        %v535 = vpop.f32.mrf.mxu0
        %536 = vmatprep.mubr.f32.mxu0 0.0
        %537 = vmatmul.mubr.f32.gmra.mxu0 %v437
        %v538 = vpop.f32.mrf.mxu0
        %v539 = vadd.f32 0.0, %v538
        %v540 = vpop.f32.mrf.mxu0
        %541 = vmatprep.mubr.f32.mxu0 0.0
        %542 = vmatmul.mubr.f32.gmra.mxu0 %v440
        %v543 = vpop.f32.mrf.mxu0
        %v544 = vadd.f32 0.0, %v543
        %v545 = vpop.f32.mrf.mxu0
        %546 = vdwg.mxu0
        %547 = vst [vmem:[#allocation2] sm:$0xff] %v509
        %548 = vst [vmem:[#allocation2 + $0x8] sm:$0xff] %v514
        %549 = vst [vmem:[#allocation2 + $0x10] sm:$0xff] %v519
        %550 = vst [vmem:[#allocation2 + $0x18] sm:$0xff] %v524
        %551 = vst [vmem:[#allocation2 + $0x20] sm:$0xff] %v529
        %552 = vst [vmem:[#allocation2 + $0x28] sm:$0xff] %v534
        %553 = vst [vmem:[#allocation2 + $0x30] sm:$0xff] %v539
        %554 = vst [vmem:[#allocation2 + $0x38] sm:$0xff] %v544
        %v555 = vld [vmem:[%s4] sm:$0x1]
        %v556 = vld [vmem:[%s4 + $0x1] sm:$0x1]
        %v557 = vld [vmem:[%s5] sm:$0x1]
        %v558 = vld [vmem:[#allocation2] sm:$0xff]
        %s559 = scalar_lea.vmem [#allocation2], 8
        %v560 = vld [vmem:[%s559] sm:$0xff]
        %vm561 = vcmp.gt.f32.partialorder %v560, %v558
        %v562 = vsel %vm561, 1, 0
        %v563 = vsel %vm561, %v560, %v558
        %v564 = vadd.f32 %v558, %v560
        %s565 = scalar_lea.vmem [#allocation2], 16
        %v566 = vld [vmem:[%s565] sm:$0xff]
        %vm567 = vcmp.gt.f32.partialorder %v566, %v563
        %v568 = vsel %vm567, 2, %v562
        %v569 = vsel %vm567, %v566, %v563
        %v570 = vadd.f32 %v564, %v566
        %s571 = scalar_lea.vmem [#allocation2], 24
        %v572 = vld [vmem:[%s571] sm:$0xff]
        %vm573 = vcmp.gt.f32.partialorder %v572, %v569
        %v574 = vsel %vm573, 3, %v568
        %v575 = vsel %vm573, %v572, %v569
        %v576 = vadd.f32 %v570, %v572
        %s577 = scalar_lea.vmem [#allocation2], 32
        %v578 = vld [vmem:[%s577] sm:$0xff]
        %vm579 = vcmp.gt.f32.partialorder %v578, %v575
        %v580 = vsel %vm579, 4, %v574
        %v581 = vsel %vm579, %v578, %v575
        %v582 = vadd.f32 %v576, %v578
        %s583 = scalar_lea.vmem [#allocation2], 40
        %v584 = vld [vmem:[%s583] sm:$0xff]
        %vm585 = vcmp.gt.f32.partialorder %v584, %v581
        %v586 = vsel %vm585, 5, %v580
        %v587 = vsel %vm585, %v584, %v581
        %v588 = vadd.f32 %v582, %v584
        %s589 = scalar_lea.vmem [#allocation2], 48
        %v590 = vld [vmem:[%s589] sm:$0xff]
        %vm591 = vcmp.gt.f32.partialorder %v590, %v587
        %v592 = vsel %vm591, 6, %v586
        %v593 = vsel %vm591, %v590, %v587
        %v594 = vadd.f32 %v588, %v590
        %s595 = scalar_lea.vmem [#allocation2], 56
        %v596 = vld [vmem:[%s595] sm:$0xff]
        %vm597 = vcmp.gt.f32.partialorder %v596, %v593
        %v598 = vsel %vm597, 7, %v592
        %v599 = vsel %vm597, %v596, %v593
        %v600 = vadd.f32 %v594, %v596
        %v601 = vld [vmem:[%s318] sm:$0xff]
        %603 = vset.pattern.permute.xlu0 0
        %604 = vperm.xlu0 %603, %v601
        %v605 = vpop.permute.xlu0 %604
        %v607 = vlaneseq
        %v608 = vshrl.u32 %v607, 7
        %v609 = vsub.s32 0, %v608
        %v610 = vrot.slane %v555, %v609
        %v611 = vmul.f32 %v605, %v610
        %612 = vset.pattern.permute.xlu0 1
        %613 = vperm.xlu0 %612, %v601
        %v614 = vpop.permute.xlu0 %613
        %v616 = vlaneseq
        %v617 = vshrl.u32 %v616, 7
        %v618 = vsub.s32 0, %v617
        %v619 = vrot.slane %v556, %v618
        %v620 = vmul.f32 %v614, %v619
        %v621 = vadd.f32 %v611, %v620
        %v623 = vlaneseq
        %v624 = vshrl.u32 %v623, 7
        %v625 = vsub.s32 0, %v624
        %v626 = vrot.slane %v557, %v625
        %v628 = vadd.f32 %v621, %v626
        %v629 = vadd.f32 %v599, %v628
        %s630 = smul.u32 0, 3
        %s631 = smul.addr %s630, 8
        %s632 = scalar_lea.vmem %s299, %s631 [#allocation3]
        %633 = vst [vmem:[%s632] sm:$0xff] %v629
        %v634 = vmul.f32 %v600, 0.125
        %v635 = vadd.f32 %v634, %v628
        %636 = vst [vmem:[%s632 + $0x8] sm:$0xff] %v635
        %v637 = vmul.f32 %v628, 8.0
        %v638 = vadd.f32 %v600, %v637
        %639 = vst [vmem:[%s632 + $0x10] sm:$0xff] %v638
        %640 = vst [vmem:[%s306] sm:$0xff] %v598
        %s641 = sand.u32 %s174, 1
        %s642 = scalar_lea.sflag [#allocation4], %s641
        %s643 = sand.u32 %s174, 1
        %s644 = smul.addr %s643, 24
        %s645 = scalar_lea.vmem [#allocation3], %s644
        %s646 = sand.u32 %s200, 1
        %s647 = scalar_lea.sflag [#allocation6], %s646
        %s648 = sand.u32 %s200, 1
        %s649 = smul.addr %s648, 8
        %s650 = scalar_lea.vmem [#allocation5], %s649
        // Predicated region
        $region45: #{tpu_custom_call.1} parent=43 // pred_check
          %p651 = pneg %p184
        $region46: #{tpu_custom_call.1} parent=43 // pred_check_branch
          %653 = sbr.rel (%p651) target = $region48
        $region47: #{tpu_custom_call.1} parent=43 // pred_region
          %s655 = ssub.s32 384, 384
          %656 = vsyncadd %s642, %s655
          %s657 = smul.addr %s25, 3
          %s658 = smul.addr %s657, 128
          %s659 = scalar_lea.hbm %s6, %s658
          %s661 = sshll.u32 %s645, 4
          %s662 = int_to_ptr.vmem [resolvable:$true] %s661
          %664 = dma.vmem_to_hbm [thread:$0]  %s662, 384, %s659, %s642
        $region48: #{tpu_custom_call.1} parent=43 // pred_fallthru
          _
        // Predicated region
        $region49: #{tpu_custom_call.1} parent=43 // pred_check
          %p665 = pneg %p210
        $region50: #{tpu_custom_call.1} parent=43 // pred_check_branch
          %667 = sbr.rel (%p665) target = $region52
        $region51: #{tpu_custom_call.1} parent=43 // pred_region
          %s669 = ssub.s32 128, 128
          %670 = vsyncadd %s647, %s669
          %s671 = smul.addr %s25, 128
          %s672 = scalar_lea.hbm %s7, %s671
          %s674 = sshll.u32 %s650, 4
          %s675 = int_to_ptr.vmem [resolvable:$true] %s674
          %677 = dma.vmem_to_hbm [thread:$0]  %s675, 128, %s672, %s647
        $region52: #{tpu_custom_call.1} parent=43 // pred_fallthru
          _
      $region44: #{tpu_custom_call.1} parent=5 // pred_fallthru
        _
      %p678 = scmp.le.s32.totalorder 2, %s20
      // Predicated region
      $region53: #{tpu_custom_call.1} parent=5 // pred_check
        %p679 = pneg %p678
      $region54: #{tpu_custom_call.1} parent=5 // pred_check_branch
        %681 = sbr.rel (%p679) target = $region56
      $region55: #{tpu_custom_call.1} parent=5 // pred_region
        %s682 = ssub.s32 %s20, 2
        // Predicated region
        $region57: #{tpu_custom_call.1} parent=55 // pred_check
          %p683 = pneg %p190
        $region58: #{tpu_custom_call.1} parent=55 // pred_check_branch
          %685 = sbr.rel (%p683) target = $region60
        $region59: #{tpu_custom_call.1} parent=55 // pred_region
          %s686 = sand.u32 %s175, 1
          %s687 = scalar_lea.sflag [#allocation4], %s686
          %s688 = sand.u32 %s175, 1
          %s689 = smul.addr %s688, 24
          %s690 = scalar_lea.vmem [#allocation3], %s689
          %691 = dma.done %s687, 384
        $region60: #{tpu_custom_call.1} parent=55 // pred_fallthru
          _
        // Predicated region
        $region61: #{tpu_custom_call.1} parent=55 // pred_check
          %p692 = pneg %p216
        $region62: #{tpu_custom_call.1} parent=55 // pred_check_branch
          %694 = sbr.rel (%p692) target = $region64
        $region63: #{tpu_custom_call.1} parent=55 // pred_region
          %s695 = sand.u32 %s201, 1
          %s696 = scalar_lea.sflag [#allocation6], %s695
          %s697 = sand.u32 %s201, 1
          %s698 = smul.addr %s697, 8
          %s699 = scalar_lea.vmem [#allocation5], %s698
          %700 = dma.done %s696, 128
        $region64: #{tpu_custom_call.1} parent=55 // pred_fallthru
          _
      $region56: #{tpu_custom_call.1} parent=5 // pred_fallthru
        _
    $region6: #{tpu_custom_call.1} parent=1 // loop_footer
      %s24 = sadd.s32 1, %s20
    $region7: #{tpu_custom_call.1} parent=1 // loop_footer_branch
      %19 = sbr.rel target = $region3
    $region8: #{tpu_custom_call.1} parent=1 // loop_exit
      _
    %701 = vsyncpa [#allocation4], 1
    %s702 = scalar_lea.sflag [#allocation4], 1
    %703 = vsyncpa %s702, 1
    %704 = vsyncpa [#allocation6], 1
    %s705 = scalar_lea.sflag [#allocation6], 1
    %706 = vsyncpa %s705, 1

</llo_original>
